<compile_context>
chip_gen: v7x
topology: tpu7x:2x2x1
jax: 0.10.0
libtpu: 0.0.40
codegen_flags: <defaults>
</compile_context>

<pallas_src>
import functools
import math

import jax
import jax.numpy as jnp
from jax.experimental import pallas as pl
from jax.experimental.pallas import tpu as pltpu


def _round_up(x: int, m: int) -> int:
    return ((x + m - 1) // m) * m


# ---------------------------------------------------------------------------
# Pallas kernel: one (batch, frame-tile) block -> lane-dense partial sums.
# ---------------------------------------------------------------------------
def _stft_loss_kernel(xf_ref, yf_ref, basis_ref, out_ref, *,
                      n_freq, n_freq_pad, n_frames, tile_frames):
    t = pl.program_id(1)

    # Stack predicted & groundtruth frames along M: the four narrow DFT matmuls
    # become a single wide MXU matmul (window already folded into the basis).
    stacked = jnp.concatenate([xf_ref[0], yf_ref[0]], axis=0)   # (2*TF, N_FFT)
    spec = jnp.dot(stacked, basis_ref[...],
                   preferred_element_type=jnp.float32)          # (2*TF, 2*NFP)

    re = spec[:, :n_freq_pad]
    im = spec[:, n_freq_pad:]
    mag = jnp.sqrt(re * re + im * im)                           # (2*TF, NFP)
    x_mag = mag[:tile_frames]
    y_mag = mag[tile_frames:]

    d = y_mag - x_mag           # padded lanes / padded frames are exactly 0 here

    lane = jax.lax.broadcasted_iota(jnp.int32, (tile_frames, n_freq_pad), 1)
    row = jax.lax.broadcasted_iota(jnp.int32, (tile_frames, n_freq_pad), 0)
    valid = (lane < n_freq) & (row + t * tile_frames < n_frames)

    # NOTE: no eps clamp before log, matching the reference module; log(0) only
    # arises from padding, which is masked out of the sum below.
    logdiff = jnp.abs(jnp.log(y_mag) - jnp.log(x_mag))
    logdiff = jnp.where(valid, logdiff, 0.0)

    r0 = jnp.sum(d * d, axis=0, keepdims=True)                  # (1, NFP)
    r1 = jnp.sum(y_mag * y_mag, axis=0, keepdims=True)
    r2 = jnp.sum(logdiff, axis=0, keepdims=True)
    out_ref[0, 0] = jnp.concatenate([r0, r1, r2], axis=0)       # (3, NFP)


# ---------------------------------------------------------------------------
# JAX glue: window / folded DFT bases / framing.
# ---------------------------------------------------------------------------
def _make_window(fft_size: int, win_length: int) -> jnp.ndarray:
    # periodic Hann window (torch.hann_window default), center-padded to n_fft
    n = jnp.arange(win_length, dtype=jnp.float32)
    w = 0.5 - 0.5 * jnp.cos(2.0 * math.pi * n / win_length)
    lpad = (fft_size - win_length) // 2
    rpad = fft_size - win_length - lpad
    return jnp.pad(w, (lpad, rpad))                             # (N_FFT,)


def _make_folded_basis(fft_size: int, win_length: int, n_freq_pad: int):
    """Window-folded, lane-padded [cos | sin] real-DFT basis."""
    n_freq = fft_size // 2 + 1
    win = _make_window(fft_size, win_length)[:, None]           # (N_FFT, 1)
    n = jnp.arange(fft_size, dtype=jnp.float32)[:, None]
    k = jnp.arange(n_freq, dtype=jnp.float32)[None, :]
    ang = 2.0 * math.pi * n * k / fft_size
    cosB = jnp.cos(ang) * win
    sinB = jnp.sin(ang) * win
    pad = n_freq_pad - n_freq
    cosB = jnp.pad(cosB, ((0, 0), (0, pad)))
    sinB = jnp.pad(sinB, ((0, 0), (0, pad)))
    return jnp.concatenate([cosB, sinB], axis=1)                # (N_FFT, 2*NFP)


def _frame_signal(x: jnp.ndarray, fft_size: int, hop: int) -> jnp.ndarray:
    # center=True, reflect pad (torch.stft / torchaudio Spectrogram defaults)
    pad = fft_size // 2
    xp = jnp.pad(x, ((0, 0), (pad, pad)), mode="reflect")
    n_frames = 1 + x.shape[1] // hop
    idx = jnp.arange(n_frames)[:, None] * hop + jnp.arange(fft_size)[None, :]
    return xp[:, idx]                                           # (B, F, N_FFT)


# ---------------------------------------------------------------------------
# Wrapper: framing + tiling + pallas_call + JAX-side finalize.
# ---------------------------------------------------------------------------
def stft_loss(x, y, *, fft_size: int, shift_size: int, win_length: int):
    x = x.astype(jnp.float32)
    y = y.astype(jnp.float32)
    B, T = x.shape
    n_freq = fft_size // 2 + 1
    n_freq_pad = _round_up(n_freq, 128)

    xf = _frame_signal(x, fft_size, shift_size)                 # (B, F, N_FFT)
    yf = _frame_signal(y, fft_size, shift_size)
    F = xf.shape[1]

    tile_frames = min(128, _round_up(F, 8))                     # multiple of 8
    f_pad = _round_up(F, tile_frames)
    num_tiles = f_pad // tile_frames
    if f_pad != F:
        xf = jnp.pad(xf, ((0, 0), (0, f_pad - F), (0, 0)))
        yf = jnp.pad(yf, ((0, 0), (0, f_pad - F), (0, 0)))

    basis = _make_folded_basis(fft_size, win_length, n_freq_pad)  # (N_FFT, 2*NFP)

    kernel = functools.partial(
        _stft_loss_kernel,
        n_freq=n_freq, n_freq_pad=n_freq_pad,
        n_frames=F, tile_frames=tile_frames)

    frame_spec = pl.BlockSpec((1, tile_frames, fft_size), lambda b, t: (b, t, 0))
    basis_spec = pl.BlockSpec((fft_size, 2 * n_freq_pad), lambda b, t: (0, 0))
    out_spec = pl.BlockSpec((1, 1, 3, n_freq_pad), lambda b, t: (b, t, 0, 0))

    flops = 2 * B * num_tiles * (2 * tile_frames) * fft_size * (2 * n_freq_pad)
    bytes_accessed = 4 * (xf.size + yf.size + basis.size
                          + B * num_tiles * 3 * n_freq_pad)
    cost = pl.CostEstimate(flops=flops,
                           transcendentals=2 * B * f_pad * n_freq_pad,
                           bytes_accessed=bytes_accessed)

    partials = pl.pallas_call(
        kernel,
        out_shape=jax.ShapeDtypeStruct((B, num_tiles, 3, n_freq_pad), jnp.float32),
        grid_spec=pltpu.PrefetchScalarGridSpec(
            num_scalar_prefetch=0,
            grid=(B, num_tiles),
            in_specs=[frame_spec, frame_spec, basis_spec],
            out_specs=out_spec,
        ),
        compiler_params=pltpu.CompilerParams(
            dimension_semantics=("parallel", "parallel"),
            vmem_limit_bytes=64 * 1024 * 1024),
        cost_estimate=cost,
    )(xf, yf, basis)

    sums = jnp.sum(partials, axis=(0, 1, 3))                    # (3,)
    sc_loss = jnp.sqrt(sums[0]) / jnp.sqrt(sums[1])
    mag_loss = sums[2] / float(B * F * n_freq)
    return sc_loss, mag_loss


# ---------------------------------------------------------------------------
# Pure-JAX reference (same math) for a sanity check.
# ---------------------------------------------------------------------------
def _ref_loss(x, y, *, fft_size, shift_size, win_length):
    win = _make_window(fft_size, win_length)[None, :]
    n_freq = fft_size // 2 + 1
    n = jnp.arange(fft_size, dtype=jnp.float32)[:, None]
    k = jnp.arange(n_freq, dtype=jnp.float32)[None, :]
    ang = 2.0 * math.pi * n * k / fft_size
    cosB, sinB = jnp.cos(ang), jnp.sin(ang)

    def mag(sig):
        f = _frame_signal(sig.astype(jnp.float32), fft_size, shift_size) * win
        re = jnp.einsum("bfn,nk->bfk", f, cosB)
        im = jnp.einsum("bfn,nk->bfk", f, sinB)
        return jnp.sqrt(re * re + im * im)                      # (B, F, N_FREQ)

    x_mag, y_mag = mag(x), mag(y)
    sc = jnp.linalg.norm(y_mag - x_mag) / jnp.linalg.norm(y_mag)
    mg = jnp.mean(jnp.abs(jnp.log(y_mag) - jnp.log(x_mag)))
    return sc, mg


if __name__ == "__main__":
    # small, module-consistent shapes: B=2, T=256; fft=64, hop=32, win=64
    B, T = 2, 256
    FFT, HOP, WIN = 64, 32, 64

    key = jax.random.PRNGKey(0)
    kx, ky = jax.random.split(key)
    x = jax.random.normal(kx, (B, T), dtype=jnp.float32)
    y = jax.random.normal(ky, (B, T), dtype=jnp.float32)

    sc, mag = stft_loss(x, y, fft_size=FFT, shift_size=HOP, win_length=WIN)
    jax.block_until_ready((sc, mag))

    sc_ref, mag_ref = _ref_loss(x, y, fft_size=FFT, shift_size=HOP, win_length=WIN)
    assert abs(float(sc) - float(sc_ref)) < 1e-3, (sc, sc_ref)
    assert abs(float(mag) - float(mag_ref)) < 1e-3, (mag, mag_ref)

    print("KERNEL_OK")
</pallas_src>

<mosaic_0001>
module attributes {stable_mosaic.version = 11 : i64} {
  func.func @_stft_loss_kernel(%arg0: i32, %arg1: i32, %arg2: memref<1x16x64xf32, #tpu.memory_space<vmem>>, %arg3: memref<1x16x64xf32, #tpu.memory_space<vmem>>, %arg4: memref<64x256xf32, #tpu.memory_space<vmem>>, %arg5: memref<1x1x3x128xf32, #tpu.memory_space<vmem>>) attributes {dimension_semantics = [#tpu.dimension_semantics<parallel>, #tpu.dimension_semantics<parallel>], iteration_bounds = array<i64: 2, 1>, scalar_prefetch = 0 : i64, scratch_operands = 0 : i64, tpu.core_type = #tpu.core_type<tc>, window_params = [{transform_indices = @transform_0, window_bounds = array<i64: 1, 16, 64>}, {transform_indices = @transform_1, window_bounds = array<i64: 1, 16, 64>}, {pipeline_mode = #tpu.pipeline_mode<synchronous>, transform_indices = @transform_2, window_bounds = array<i64: 64, 256>}, {transform_indices = @transform_3, window_bounds = array<i64: 1, 1, 3, 128>}]} {
    %c0 = arith.constant 0 : index
    %c0_0 = arith.constant 0 : index
    %c0_1 = arith.constant 0 : index
    %0 = vector.load %arg2[%c0, %c0_0, %c0_1] : memref<1x16x64xf32, #tpu.memory_space<vmem>>, vector<1x16x64xf32>
    %1 = vector.shape_cast %0 : vector<1x16x64xf32> to vector<16x64xf32>
    %c0_2 = arith.constant 0 : index
    %c0_3 = arith.constant 0 : index
    %c0_4 = arith.constant 0 : index
    %2 = vector.load %arg3[%c0_2, %c0_3, %c0_4] : memref<1x16x64xf32, #tpu.memory_space<vmem>>, vector<1x16x64xf32>
    %3 = vector.shape_cast %2 : vector<1x16x64xf32> to vector<16x64xf32>
    %4 = tpu.concatenate %1, %3 in 0 : vector<16x64xf32>, vector<16x64xf32> -> vector<32x64xf32>
    %c0_5 = arith.constant 0 : index
    %c0_6 = arith.constant 0 : index
    %5 = vector.load %arg4[%c0_5, %c0_6] : memref<64x256xf32, #tpu.memory_space<vmem>>, vector<64x256xf32>
    %cst = arith.constant dense<0.000000e+00> : vector<32x256xf32>
    %6 = tpu.matmul %4, %5, %cst {dimension_numbers = #tpu.dot_dimension_numbers<[1], [0], [0], [1], [0, 0, 1, 1], [], []>} : vector<32x64xf32>, vector<64x256xf32>, vector<32x256xf32> -> vector<32x256xf32>
    %7 = vector.extract_strided_slice %6 {offsets = [0, 0], sizes = [32, 128], strides = [1, 1]} : vector<32x256xf32> to vector<32x128xf32>
    %8 = vector.extract_strided_slice %6 {offsets = [0, 128], sizes = [32, 128], strides = [1, 1]} : vector<32x256xf32> to vector<32x128xf32>
    %9 = arith.mulf %7, %7 : vector<32x128xf32>
    %10 = arith.mulf %8, %8 : vector<32x128xf32>
    %11 = arith.addf %9, %10 : vector<32x128xf32>
    %12 = math.sqrt %11 : vector<32x128xf32>
    %13 = vector.extract_strided_slice %12 {offsets = [0, 0], sizes = [16, 128], strides = [1, 1]} : vector<32x128xf32> to vector<16x128xf32>
    %14 = vector.extract_strided_slice %12 {offsets = [16, 0], sizes = [16, 128], strides = [1, 1]} : vector<32x128xf32> to vector<16x128xf32>
    %15 = arith.subf %14, %13 : vector<16x128xf32>
    %16 = tpu.iota {dimensions = array<i32: 1>} : vector<16x128xi32>
    %17 = tpu.iota {dimensions = array<i32: 0>} : vector<16x128xi32>
    %c33_i32 = arith.constant 33 : i32
    %18 = vector.broadcast %c33_i32 : i32 to vector<16x128xi32>
    %19 = arith.cmpi slt, %16, %18 : vector<16x128xi32>
    %c16_i32 = arith.constant 16 : i32
    %20 = arith.muli %arg1, %c16_i32 : i32
    %21 = vector.broadcast %20 : i32 to vector<16x128xi32>
    %22 = arith.addi %17, %21 : vector<16x128xi32>
    %c9_i32 = arith.constant 9 : i32
    %23 = vector.broadcast %c9_i32 : i32 to vector<16x128xi32>
    %24 = arith.cmpi slt, %22, %23 : vector<16x128xi32>
    %25 = arith.andi %19, %24 : vector<16x128xi1>
    %26 = math.log %14 : vector<16x128xf32>
    %27 = math.log %13 : vector<16x128xf32>
    %28 = arith.subf %26, %27 : vector<16x128xf32>
    %29 = math.absf %28 : vector<16x128xf32>
    %cst_7 = arith.constant 0.000000e+00 : f32
    %30 = vector.broadcast %cst_7 : f32 to vector<16x128xf32>
    %31 = arith.select %25, %29, %30 : vector<16x128xi1>, vector<16x128xf32>
    %32 = arith.mulf %15, %15 : vector<16x128xf32>
    %cst_8 = arith.constant dense<0.000000e+00> : vector<128xf32>
    %33 = vector.multi_reduction <add>, %32, %cst_8 [0] : vector<16x128xf32> to vector<128xf32>
    %34 = vector.shape_cast %33 : vector<128xf32> to vector<1x128xf32>
    %35 = arith.mulf %14, %14 : vector<16x128xf32>
    %cst_9 = arith.constant dense<0.000000e+00> : vector<128xf32>
    %36 = vector.multi_reduction <add>, %35, %cst_9 [0] : vector<16x128xf32> to vector<128xf32>
    %37 = vector.shape_cast %36 : vector<128xf32> to vector<1x128xf32>
    %cst_10 = arith.constant dense<0.000000e+00> : vector<128xf32>
    %38 = vector.multi_reduction <add>, %31, %cst_10 [0] : vector<16x128xf32> to vector<128xf32>
    %39 = vector.shape_cast %38 : vector<128xf32> to vector<1x128xf32>
    %40 = tpu.concatenate %34, %37, %39 in 0 : vector<1x128xf32>, vector<1x128xf32>, vector<1x128xf32> -> vector<3x128xf32>
    %c0_11 = arith.constant 0 : index
    %c0_12 = arith.constant 0 : index
    %c0_13 = arith.constant 0 : index
    %c0_14 = arith.constant 0 : index
    %41 = vector.load %arg5[%c0_11, %c0_12, %c0_13, %c0_14] : memref<1x1x3x128xf32, #tpu.memory_space<vmem>>, vector<1x1x3x128xf32>
    %42 = vector.shape_cast %41 : vector<1x1x3x128xf32> to vector<3x128xf32>
    %43 = vector.shape_cast %40 : vector<3x128xf32> to vector<1x1x3x128xf32>
    tpu.vector_store %arg5[%c0_11, %c0_12, %c0_13, %c0_14], %43 {strides = array<i32>} : memref<1x1x3x128xf32, #tpu.memory_space<vmem>>, vector<1x1x3x128xf32>,
    return
  }
  func.func @transform_0(%arg0: i32, %arg1: i32) -> (i32, i32, i32) {
    %c0_i32 = arith.constant 0 : i32
    %c0_i32_0 = arith.constant 0 : i32
    return %arg0, %arg1, %c0_i32 : i32, i32, i32
  }
  func.func @transform_1(%arg0: i32, %arg1: i32) -> (i32, i32, i32) {
    %c0_i32 = arith.constant 0 : i32
    %c0_i32_0 = arith.constant 0 : i32
    return %arg0, %arg1, %c0_i32 : i32, i32, i32
  }
  func.func @transform_2(%arg0: i32, %arg1: i32) -> (i32, i32) {
    %c0_i32 = arith.constant 0 : i32
    %c0_i32_0 = arith.constant 0 : i32
    %c0_i32_1 = arith.constant 0 : i32
    return %c0_i32, %c0_i32_0 : i32, i32
  }
  func.func @transform_3(%arg0: i32, %arg1: i32) -> (i32, i32, i32, i32) {
    %c0_i32 = arith.constant 0 : i32
    %c0_i32_0 = arith.constant 0 : i32
    %c0_i32_1 = arith.constant 0 : i32
    return %arg0, %arg1, %c0_i32, %c0_i32_0 : i32, i32, i32, i32
  }
}

</mosaic_0001>

<llo_original>
// kernel: tpu_custom_call.1
$region0: #{tpu_custom_call.1}
  #allocation0 [shape = 'u32[]', space=smem, size = 0x4, offset = 0x4, fixed_abs, tag = 'smem constant byte address 0x4 - core index']
  #allocation1 [shape = 'u32[144,128]{1,0:T(1,128)}', space=vmem, size = 0x12000, scoped, tag = 'internal scratch']
  %s0 = inlined_call_operand.hbm [shape: f32[2,16,64], index: 0, kind: input, shape index: {}]
  %s1 = inlined_call_operand.hbm [shape: f32[2,16,64], index: 1, kind: input, shape index: {}]
  %s2 = inlined_call_operand.hbm [shape: f32[64,256], index: 2, kind: input, shape index: {}]
  %s3 = inlined_call_operand.hbm [shape: f32[2,1,3,128], index: 3, kind: output, shape index: {}]
  %s4 = sld [smem:[#allocation0]]
  $region57: #{tpu_custom_call.1} parent=0
    _
  %s6 = ssub.s32 1, %s4
  %s7 = scalar_select 0, %s6, %s4
  $region1: #{tpu_custom_call.1} parent=0
    #allocation2 [shape = 'u8[16384]{0}', space=vmem, size = 0x4000, scoped, tag = 'input window, operand 0']
    #allocation3 [shape = 's32[2]{0}', space=sflag, size = 0x8, scoped, tag = 'scoped memory for tpu_custom_call.1']
    #allocation4 [shape = 's32[2]{0}', space=sflag, size = 0x8, scoped, tag = 'scoped memory for tpu_custom_call.1']
    #allocation5 [shape = 'u8[16384]{0}', space=vmem, size = 0x4000, scoped, tag = 'input window, operand 1']
    #allocation6 [shape = 's32[2]{0}', space=sflag, size = 0x8, scoped, tag = 'scoped memory for tpu_custom_call.1']
    #allocation7 [shape = 'u8[65536]{0}', space=vmem, size = 0x10000, scoped, tag = 'input window, operand 2, single buffered']
    #allocation8 [shape = 'u8[4096]{0}', space=vmem, size = 0x1000, scoped, tag = 'output window, operand 0']
    %8 = vsyncpa [#allocation3], 0
    %s9 = scalar_lea.sflag [#allocation3], 1
    %10 = vsyncpa %s9, 0
    %11 = vsyncpa [#allocation6], 0
    %s12 = scalar_lea.sflag [#allocation6], 1
    %13 = vsyncpa %s12, 0
    %14 = vsyncpa [#allocation4], 0
    %s15 = scalar_lea.sflag [#allocation4], 1
    %16 = vsyncpa %s15, 0
    loop: start=0, step=1, limit=4
    $region2: #{tpu_custom_call.1} parent=1 // loop_pre_header
      _
    $region3: #{tpu_custom_call.1} parent=1 // loop_header
      %s18 = sphi 0, %s22
      %p19 = scmp.ge.s32.totalorder %s18, 4
      %s25 = sphi 0, %s37
      %s26 = sphi 0, %s33
      %s27 = sphi 0, %s25
      %s28 = sphi 0, %s26
      %s29 = sphi 0, %s27
      %s30 = sphi 0, %s28
      %s42 = sphi 0, %s44
      %s45 = sphi 0, %s42
      %s46 = sphi 0, %s45
      %s62 = sphi 0, %s46
      %s70 = sphi 0, %s72
      %s73 = sphi 0, %s70
      %s74 = sphi 0, %s73
      %s90 = sphi 0, %s74
      %s94 = sphi 0, %s94
      %s96 = sphi 0, %s94
      %s97 = sphi 0, %s96
      %s111 = sphi 0, %s97
      %s119 = sphi 0, %s121
      %s122 = sphi 0, %s119
      %s123 = sphi 0, %s122
      %s139 = sphi 0, %s123
    $region4: #{tpu_custom_call.1} parent=1 // loop_header_branch
      %21 = sbr.rel (%p19) target = $region8
    $region5: #{tpu_custom_call.1} parent=1 // loop_body
      %s23 = ssub.s32 %s18, 1
      %s24 = ssub.s32 %s18, 2
      %s31 = sadd.s32 1, %s26
      %p32 = scmp.ge.s32.totalorder %s31, 1
      %s33 = scalar_select %p32, 0, %s31
      %s34 = sadd.s32 1, %s25
      %s35 = scalar_select %p32, %s34, %s25
      %p36 = scmp.ge.s32.totalorder %s35, 2
      %s37 = scalar_select %p36, 0, %s35
      %s38 = ssub.s32 %s25, %s37
      %s39 = ssub.s32 %s26, %s33
      %s40 = sor.u32 %s38, %s39
      %p41 = scmp.eq.s32.totalorder %s40, 0
      %s43 = sadd.s32 %s42, 1
      %s44 = scalar_select %p41, %s42, %s43
      %p47 = pneg %p41
      %p48 = scmp.eq.s32.totalorder %s18, 1
      %p49 = por %p47, %p48
      %p50 = scmp.ne.s32.totalorder %s42, %s45
      %p51 = scmp.eq.s32.totalorder %s18, 0
      %p52 = por %p50, %p51
      %p53 = scmp.ne.s32.totalorder %s42, %s45
      %p54 = scmp.eq.s32.totalorder %s23, 1
      %p55 = por %p53, %p54
      %p56 = scmp.ne.s32.totalorder %s45, %s46
      %p57 = scmp.eq.s32.totalorder %s23, 0
      %p58 = por %p56, %p57
      %p59 = scmp.ne.s32.totalorder %s45, %s46
      %p60 = scmp.eq.s32.totalorder %s24, 1
      %p61 = por %p59, %p60
      %p63 = scmp.ne.s32.totalorder %s46, %s62
      %p64 = scmp.eq.s32.totalorder %s24, 0
      %p65 = por %p63, %p64
      %s66 = ssub.s32 %s25, %s37
      %s67 = ssub.s32 %s26, %s33
      %s68 = sor.u32 %s66, %s67
      %p69 = scmp.eq.s32.totalorder %s68, 0
      %s71 = sadd.s32 %s70, 1
      %s72 = scalar_select %p69, %s70, %s71
      %p75 = pneg %p69
      %p76 = scmp.eq.s32.totalorder %s18, 1
      %p77 = por %p75, %p76
      %p78 = scmp.ne.s32.totalorder %s70, %s73
      %p79 = scmp.eq.s32.totalorder %s18, 0
      %p80 = por %p78, %p79
      %p81 = scmp.ne.s32.totalorder %s70, %s73
      %p82 = scmp.eq.s32.totalorder %s23, 1
      %p83 = por %p81, %p82
      %p84 = scmp.ne.s32.totalorder %s73, %s74
      %p85 = scmp.eq.s32.totalorder %s23, 0
      %p86 = por %p84, %p85
      %p87 = scmp.ne.s32.totalorder %s73, %s74
      %p88 = scmp.eq.s32.totalorder %s24, 1
      %p89 = por %p87, %p88
      %p91 = scmp.ne.s32.totalorder %s74, %s90
      %p92 = scmp.eq.s32.totalorder %s24, 0
      %p93 = por %p91, %p92
      %s95 = sadd.s32 %s94, 1
      %p98 = scmp.eq.s32.totalorder %s18, 1
      %p99 = scmp.ne.s32.totalorder %s94, %s96
      %p100 = scmp.eq.s32.totalorder %s18, 0
      %p101 = por %p99, %p100
      %p102 = scmp.ne.s32.totalorder %s94, %s96
      %p103 = scmp.eq.s32.totalorder %s23, 1
      %p104 = por %p102, %p103
      %p105 = scmp.ne.s32.totalorder %s96, %s97
      %p106 = scmp.eq.s32.totalorder %s23, 0
      %p107 = por %p105, %p106
      %p108 = scmp.ne.s32.totalorder %s96, %s97
      %p109 = scmp.eq.s32.totalorder %s24, 1
      %p110 = por %p108, %p109
      %p112 = scmp.ne.s32.totalorder %s97, %s111
      %p113 = scmp.eq.s32.totalorder %s24, 0
      %p114 = por %p112, %p113
      %s115 = ssub.s32 %s25, %s37
      %s116 = ssub.s32 %s26, %s33
      %s117 = sor.u32 %s115, %s116
      %p118 = scmp.eq.s32.totalorder %s117, 0
      %s120 = sadd.s32 %s119, 1
      %s121 = scalar_select %p118, %s119, %s120
      %p124 = pneg %p118
      %p125 = scmp.eq.s32.totalorder %s18, 1
      %p126 = por %p124, %p125
      %p127 = scmp.ne.s32.totalorder %s119, %s122
      %p128 = scmp.eq.s32.totalorder %s18, 0
      %p129 = por %p127, %p128
      %p130 = scmp.ne.s32.totalorder %s119, %s122
      %p131 = scmp.eq.s32.totalorder %s23, 1
      %p132 = por %p130, %p131
      %p133 = scmp.ne.s32.totalorder %s122, %s123
      %p134 = scmp.eq.s32.totalorder %s23, 0
      %p135 = por %p133, %p134
      %p136 = scmp.ne.s32.totalorder %s122, %s123
      %p137 = scmp.eq.s32.totalorder %s24, 1
      %p138 = por %p136, %p137
      %p140 = scmp.ne.s32.totalorder %s123, %s139
      %p141 = scmp.eq.s32.totalorder %s24, 0
      %p142 = por %p140, %p141
      %p143 = scmp.le.s32.totalorder 1, %s18
      %p144 = scmp.lt.s32.totalorder %s18, 3
      %p145 = pnand %p143, %p144
      %p146 = pneg %p145
      // Predicated region
      $region9: #{tpu_custom_call.1} parent=5 // pred_check
        _
      $region10: #{tpu_custom_call.1} parent=5 // pred_check_branch
        %148 = sbr.rel (%p145) target = $region12
      $region11: #{tpu_custom_call.1} parent=5 // pred_region
        %s149 = ssub.s32 %s18, 1
        // Predicated region
        $region13: #{tpu_custom_call.1} parent=11 // pred_check
          %p150 = pneg %p107
        $region14: #{tpu_custom_call.1} parent=11 // pred_check_branch
          %152 = sbr.rel (%p150) target = $region16
        $region15: #{tpu_custom_call.1} parent=11 // pred_region
          %s154 = ssub.s32 2048, 2048
          %155 = vsyncadd [#allocation6], %s154
          %s156 = sshll.u32 [#allocation7], 4
          %s157 = int_to_ptr.vmem [resolvable:$true] %s156
          %162 = dma.hbm_to_vmem [thread:$0]  %s2, 2048, %s157, [#allocation6], 256, 256, 16
        $region16: #{tpu_custom_call.1} parent=11 // pred_fallthru
          _
      $region12: #{tpu_custom_call.1} parent=5 // pred_fallthru
        _
      %p163 = scmp.lt.s32.totalorder %s18, 2
      // Predicated region
      $region17: #{tpu_custom_call.1} parent=5 // pred_check
        %p164 = pneg %p163
      $region18: #{tpu_custom_call.1} parent=5 // pred_check_branch
        %166 = sbr.rel (%p164) target = $region20
      $region19: #{tpu_custom_call.1} parent=5 // pred_region
        // Predicated region
        $region21: #{tpu_custom_call.1} parent=19 // pred_check
          %p167 = pneg %p52
        $region22: #{tpu_custom_call.1} parent=19 // pred_check_branch
          %169 = sbr.rel (%p167) target = $region24
        $region23: #{tpu_custom_call.1} parent=19 // pred_region
          %s170 = sand.u32 %s42, 1
          %s171 = scalar_lea.sflag [#allocation3], %s170
          %s172 = sand.u32 %s42, 1
          %s173 = smul.addr %s172, 16
          %s174 = scalar_lea.vmem [#allocation2], %s173
          %s175 = smul.u32 2, %s26
          %s177 = ssub.s32 256, 256
          %178 = vsyncadd %s171, %s177
          %s179 = smul.addr %s25, 2
          %s180 = sadd.s32 %s175, %s179
          %s181 = smul.addr %s180, 128
          %s182 = scalar_lea.hbm %s0, %s181
          %s183 = sshll.u32 %s174, 4
          %s184 = int_to_ptr.vmem [resolvable:$true] %s183
          %189 = dma.hbm_to_vmem [thread:$0]  %s182, 256, %s184, %s171, 128, 128, 8
        $region24: #{tpu_custom_call.1} parent=19 // pred_fallthru
          _
        // Predicated region
        $region25: #{tpu_custom_call.1} parent=19 // pred_check
          %p190 = pneg %p80
        $region26: #{tpu_custom_call.1} parent=19 // pred_check_branch
          %192 = sbr.rel (%p190) target = $region28
        $region27: #{tpu_custom_call.1} parent=19 // pred_region
          %s193 = sand.u32 %s18, 1
          %s194 = scalar_lea.sflag [#allocation6], %s193
          %s195 = sand.u32 %s70, 1
          %s196 = smul.addr %s195, 16
          %s197 = scalar_lea.vmem [#allocation5], %s196
          %s198 = smul.u32 2, %s26
          %s200 = ssub.s32 256, 256
          %201 = vsyncadd %s194, %s200
          %s202 = smul.addr %s25, 2
          %s203 = sadd.s32 %s198, %s202
          %s204 = smul.addr %s203, 128
          %s205 = scalar_lea.hbm %s1, %s204
          %s206 = sshll.u32 %s197, 4
          %s207 = int_to_ptr.vmem [resolvable:$true] %s206
          %212 = dma.hbm_to_vmem [thread:$0]  %s205, 256, %s207, %s194, 128, 128, 8
        $region28: #{tpu_custom_call.1} parent=19 // pred_fallthru
          _
      $region20: #{tpu_custom_call.1} parent=5 // pred_fallthru
        _
      %p213 = scmp.le.s32.totalorder 1, %s18
      %p214 = scmp.lt.s32.totalorder %s18, 3
      %p215 = pnand %p213, %p214
      %p216 = pneg %p215
      // Predicated region
      $region29: #{tpu_custom_call.1} parent=5 // pred_check
        _
      $region30: #{tpu_custom_call.1} parent=5 // pred_check_branch
        %218 = sbr.rel (%p215) target = $region32
      $region31: #{tpu_custom_call.1} parent=5 // pred_region
        %s219 = ssub.s32 %s18, 1
        %s220 = sand.u32 %s45, 1
        %s221 = scalar_lea.sflag [#allocation3], %s220
        %s222 = sand.u32 %s45, 1
        %s223 = smul.addr %s222, 16
        %s224 = scalar_lea.vmem [#allocation2], %s223
        // Predicated region
        $region33: #{tpu_custom_call.1} parent=31 // pred_check
          %p225 = pneg %p58
        $region34: #{tpu_custom_call.1} parent=31 // pred_check_branch
          %227 = sbr.rel (%p225) target = $region36
        $region35: #{tpu_custom_call.1} parent=31 // pred_region
          %228 = dma.done %s221, 256
        $region36: #{tpu_custom_call.1} parent=31 // pred_fallthru
          _
        %s229 = sand.u32 %s23, 1
        %s230 = scalar_lea.sflag [#allocation6], %s229
        %s231 = sand.u32 %s73, 1
        %s232 = smul.addr %s231, 16
        %s233 = scalar_lea.vmem [#allocation5], %s232
        // Predicated region
        $region37: #{tpu_custom_call.1} parent=31 // pred_check
          %p234 = pneg %p86
        $region38: #{tpu_custom_call.1} parent=31 // pred_check_branch
          %236 = sbr.rel (%p234) target = $region40
        $region39: #{tpu_custom_call.1} parent=31 // pred_region
          %237 = dma.done %s230, 256
        $region40: #{tpu_custom_call.1} parent=31 // pred_fallthru
          _
        // Predicated region
        $region41: #{tpu_custom_call.1} parent=31 // pred_check
          %p238 = pneg %p107
        $region42: #{tpu_custom_call.1} parent=31 // pred_check_branch
          %240 = sbr.rel (%p238) target = $region44
        $region43: #{tpu_custom_call.1} parent=31 // pred_region
          %241 = dma.done [#allocation6], 2048
        $region44: #{tpu_custom_call.1} parent=31 // pred_fallthru
          _
        %s242 = sand.u32 %s45, 1
        %s243 = scalar_lea.sflag [#allocation3], %s242
        %s244 = sand.u32 %s45, 1
        %s245 = smul.addr %s244, 16
        %s246 = scalar_lea.vmem [#allocation2], %s245
        %p247 = pneg %p58
        %p248 = pneg %p55
        %s249 = sand.u32 %s23, 1
        %s250 = scalar_lea.sflag [#allocation6], %s249
        %s251 = sand.u32 %s73, 1
        %s252 = smul.addr %s251, 16
        %s253 = scalar_lea.vmem [#allocation5], %s252
        %p254 = pneg %p86
        %p255 = pneg %p83
        %p256 = pneg %p107
        %p257 = pneg %p104
        %p258 = pneg %p135
        %p259 = pneg %p132
        %s260 = sand.u32 %s122, 1
        %s261 = scalar_lea.sflag [#allocation4], %s260
        %s262 = sand.u32 %s122, 1
        %s263 = smul.addr %s262, 4
        %s264 = scalar_lea.vmem [#allocation8], %s263
        %s265 = smul.u32 2, %s28
        %s266 = smul.u32 2, %s28
        %v267 = vld [vmem:[%s224] sm:$0xff]
        %v268 = vld [vmem:[%s224 + $0x8] sm:$0xff]
        %v269 = vld [vmem:[%s233] sm:$0xff]
        %v270 = vld [vmem:[%s233 + $0x8] sm:$0xff]
        %v271 = vld [vmem:[#allocation7] sm:$0xff]
        %v272 = vld [vmem:[#allocation7 + $0x8] sm:$0xff]
        %v273 = vld [vmem:[#allocation7 + $0x10] sm:$0xff]
        %v274 = vld [vmem:[#allocation7 + $0x18] sm:$0xff]
        %v275 = vld [vmem:[#allocation7 + $0x20] sm:$0xff]
        %v276 = vld [vmem:[#allocation7 + $0x28] sm:$0xff]
        %v277 = vld [vmem:[#allocation7 + $0x30] sm:$0xff]
        %v278 = vld [vmem:[#allocation7 + $0x38] sm:$0xff]
        %v279 = vld [vmem:[#allocation7 + $0x40] sm:$0xff]
        %v280 = vld [vmem:[#allocation7 + $0x48] sm:$0xff]
        %v281 = vld [vmem:[#allocation7 + $0x50] sm:$0xff]
        %v282 = vld [vmem:[#allocation7 + $0x58] sm:$0xff]
        %v283 = vld [vmem:[#allocation7 + $0x60] sm:$0xff]
        %v284 = vld [vmem:[#allocation7 + $0x68] sm:$0xff]
        %v285 = vld [vmem:[#allocation7 + $0x70] sm:$0xff]
        %v286 = vld [vmem:[#allocation7 + $0x78] sm:$0xff]
        %vm287 = vcmask 523264
        %v289 = vsel %vm287, %v267, 0
        %v292 = vsel %vm287, %v268, 0
        %v295 = vsel %vm287, %v269, 0
        %v298 = vsel %vm287, %v270, 0
        %300 = vmatprep.subr.mxu0 %v272
        %301 = vmatpush1.msra.mxu0 %v271
        %302 = vmatprep.subr.mxu0 %v274
        %303 = vmatpush1.msra.mxu0 %v273
        %304 = vmatprep.subr.mxu0 %v276
        %305 = vmatpush1.msra.mxu0 %v275
        %306 = vmatprep.subr.mxu0 %v278
        %307 = vmatpush1.msra.mxu0 %v277
        %308 = vmatprep.subr.mxu0 %v280
        %309 = vmatpush1.msra.mxu0 %v279
        %310 = vmatprep.subr.mxu0 %v282
        %311 = vmatpush1.msra.mxu0 %v281
        %312 = vmatprep.subr.mxu0 %v284
        %313 = vmatpush1.msra.mxu0 %v283
        %314 = vmatprep.subr.mxu0 %v286
        %315 = vmatpush1.msra.mxu0 %v285
        %316 = vmatprep.subr.mxu0 0.0
        %317 = vmatpush1.msra.mxu0 0.0
        %318 = vmatprep.subr.mxu0 0.0
        %319 = vmatpush1.msra.mxu0 0.0
        %320 = vmatprep.subr.mxu0 0.0
        %321 = vmatpush1.msra.mxu0 0.0
        %322 = vmatprep.subr.mxu0 0.0
        %323 = vmatpush1.msra.mxu0 0.0
        %324 = vmatprep.subr.mxu0 0.0
        %325 = vmatpush1.msra.mxu0 0.0
        %326 = vmatprep.subr.mxu0 0.0
        %327 = vmatpush1.msra.mxu0 0.0
        %328 = vmatprep.subr.mxu0 0.0
        %329 = vmatpush1.msra.mxu0 0.0
        %330 = vmatprep.subr.mxu0 0.0
        %331 = vmatpush1.msra.mxu0 0.0
        %332 = vmatprep.subr.mxu0 0.0
        %333 = vmatpush1.msra.mxu0 0.0
        %334 = vmatprep.subr.mxu0 0.0
        %335 = vmatpush1.msra.mxu0 0.0
        %336 = vmatprep.subr.mxu0 0.0
        %337 = vmatpush1.msra.mxu0 0.0
        %338 = vmatprep.subr.mxu0 0.0
        %339 = vmatpush1.msra.mxu0 0.0
        %340 = vmatprep.subr.mxu0 0.0
        %341 = vmatpush1.msra.mxu0 0.0
        %342 = vmatprep.subr.mxu0 0.0
        %343 = vmatpush1.msra.mxu0 0.0
        %344 = vmatprep.subr.mxu0 0.0
        %345 = vmatpush1.msra.mxu0 0.0
        %346 = vmatprep.subr.mxu0 0.0
        %347 = vmatpush1.msra.mxu0 0.0
        %348 = vmatprep.subr.mxu0 0.0
        %349 = vmatpush1.msra.mxu0 0.0
        %350 = vmatprep.subr.mxu0 0.0
        %351 = vmatpush1.msra.mxu0 0.0
        %352 = vmatprep.subr.mxu0 0.0
        %353 = vmatpush1.msra.mxu0 0.0
        %354 = vmatprep.subr.mxu0 0.0
        %355 = vmatpush1.msra.mxu0 0.0
        %356 = vmatprep.subr.mxu0 0.0
        %357 = vmatpush1.msra.mxu0 0.0
        %358 = vmatprep.subr.mxu0 0.0
        %359 = vmatpush1.msra.mxu0 0.0
        %360 = vmatprep.subr.mxu0 0.0
        %361 = vmatpush1.msra.mxu0 0.0
        %362 = vmatprep.subr.mxu0 0.0
        %363 = vmatpush1.msra.mxu0 0.0
        %364 = vmatprep.mubr.f32.mxu0 0.0
        %365 = vmatmul.mubr.f32.gmra.mrb[0].mxu0 %v289
        %v366 = vpop.f32.mrb[0].mxu0
        %v367 = vadd.f32 0.0, %v366
        %v368 = vpop.f32.mrb[0].mxu0
        %v369 = vadd.f32 0.0, %v368
        %370 = vmatprep.mubr.f32.mxu0 0.0
        %371 = vmatmul.mubr.f32.gmra.mrb[0].mxu0 %v292
        %v372 = vpop.f32.mrb[0].mxu0
        %v373 = vadd.f32 0.0, %v372
        %v374 = vpop.f32.mrb[0].mxu0
        %v375 = vadd.f32 0.0, %v374
        %376 = vmatprep.mubr.f32.mxu0 0.0
        %377 = vmatmul.mubr.f32.gmra.mrb[0].mxu0 %v295
        %v378 = vpop.f32.mrb[0].mxu0
        %v379 = vadd.f32 0.0, %v378
        %v380 = vpop.f32.mrb[0].mxu0
        %v381 = vadd.f32 0.0, %v380
        %382 = vmatprep.mubr.f32.mxu0 0.0
        %383 = vmatmul.mubr.f32.gmra.mrb[0].mxu0 %v298
        %v384 = vpop.f32.mrb[0].mxu0
        %v385 = vadd.f32 0.0, %v384
        %v386 = vpop.f32.mrb[0].mxu0
        %v387 = vadd.f32 0.0, %v386
        %388 = vdwg.mxu0
        %v389 = vmul.f32 %v367, %v367
        %v390 = vmul.f32 %v373, %v373
        %v391 = vmul.f32 %v379, %v379
        %v392 = vmul.f32 %v385, %v385
        %v393 = vmul.f32 %v369, %v369
        %v394 = vmul.f32 %v375, %v375
        %v395 = vmul.f32 %v381, %v381
        %v396 = vmul.f32 %v387, %v387
        %v397 = vadd.f32 %v389, %v393
        %v398 = vadd.f32 %v390, %v394
        %v399 = vadd.f32 %v391, %v395
        %v400 = vadd.f32 %v392, %v396
        %v401 = vrsqrt.pop %v397
        %v402 = vmul.f32 %v397, %v401
        %vm403 = vcmp.eq.f32.partialorder %v397, inf
        %v404 = vsel %vm403, %v397, %v402
        %vm405 = vcmp.eq.f32.partialorder %v397, 0.0
        %v406 = vand.u32 %v397, 2147483648
        %v407 = vsel %vm405, %v406, %v404
        %v408 = vrsqrt.pop %v398
        %v409 = vmul.f32 %v398, %v408
        %vm410 = vcmp.eq.f32.partialorder %v398, inf
        %v411 = vsel %vm410, %v398, %v409
        %vm412 = vcmp.eq.f32.partialorder %v398, 0.0
        %v413 = vand.u32 %v398, 2147483648
        %v414 = vsel %vm412, %v413, %v411
        %v415 = vrsqrt.pop %v399
        %v416 = vmul.f32 %v399, %v415
        %vm417 = vcmp.eq.f32.partialorder %v399, inf
        %v418 = vsel %vm417, %v399, %v416
        %vm419 = vcmp.eq.f32.partialorder %v399, 0.0
        %v420 = vand.u32 %v399, 2147483648
        %v421 = vsel %vm419, %v420, %v418
        %v422 = vrsqrt.pop %v400
        %v423 = vmul.f32 %v400, %v422
        %vm424 = vcmp.eq.f32.partialorder %v400, inf
        %v425 = vsel %vm424, %v400, %v423
        %vm426 = vcmp.eq.f32.partialorder %v400, 0.0
        %v427 = vand.u32 %v400, 2147483648
        %v428 = vsel %vm426, %v427, %v425
        %v429 = vsub.f32 %v421, %v407
        %v430 = vsub.f32 %v428, %v414
        %v431 = vlaneseq
        %v432 = vand.u32 %v431, 127
        %v433 = vlaneseq
        %v434 = vshrl.u32 %v433, 7
        %v435 = vadd.s32 %v434, 8
        %vm436 = vcmp.lt.s32.totalorder %v432, 33
        %s437 = smul.u32 %s28, 16
        %v438 = vstv %s437
        %v439 = vadd.s32 %v434, %v438
        %v440 = vadd.s32 %v435, %v438
        %vm441 = vcmp.lt.s32.totalorder %v439, 9
        %vm442 = vcmp.lt.s32.totalorder %v440, 9
        %vm443 = vmand %vm436, %vm441
        %vm444 = vmand %vm436, %vm442
        %v445 = vlog2.pop %v421
        %v446 = vmul.f32 %v445, 0.6931472
        %v447 = vlog2.pop %v428
        %v448 = vmul.f32 %v447, 0.6931472
        %v449 = vlog2.pop %v407
        %v450 = vmul.f32 %v449, 0.6931472
        %v451 = vlog2.pop %v414
        %v452 = vmul.f32 %v451, 0.6931472
        %v453 = vsub.f32 %v446, %v450
        %v454 = vsub.f32 %v448, %v452
        %v455 = vand.u32 2147483647, %v453
        %v456 = vand.u32 2147483647, %v454
        %v457 = vsel %vm443, %v455, 0.0
        %v458 = vsel %vm444, %v456, 0.0
        %v459 = vmul.f32 %v429, %v429
        %v460 = vmul.f32 %v430, %v430
        %v461 = vadd.f32 %v459, %v460
        %v462 = vrot.slane %v461, 4
        %v463 = vadd.f32 %v461, %v462
        %v464 = vrot.slane %v463, 2
        %v465 = vadd.f32 %v463, %v464
        %v466 = vrot.slane %v465, 1
        %v467 = vadd.f32 %v465, %v466
        %v468 = vmul.f32 %v421, %v421
        %v469 = vmul.f32 %v428, %v428
        %v470 = vadd.f32 %v468, %v469
        %v471 = vrot.slane %v470, 4
        %v472 = vadd.f32 %v470, %v471
        %v473 = vrot.slane %v472, 2
        %v474 = vadd.f32 %v472, %v473
        %v475 = vrot.slane %v474, 1
        %v476 = vadd.f32 %v474, %v475
        %v477 = vadd.f32 %v457, %v458
        %v478 = vrot.slane %v477, 4
        %v479 = vadd.f32 %v477, %v478
        %v480 = vrot.slane %v479, 2
        %v481 = vadd.f32 %v479, %v480
        %v482 = vrot.slane %v481, 1
        %v483 = vadd.f32 %v481, %v482
        %vm484 = vcmask 1040384
        %v485 = vsel %vm484, %v467, %v476
        %vm486 = vcmask 1041408
        %v487 = vsel %vm486, %v485, %v483
        %488 = vst [vmem:[%s264] sm:$0x7] %v487
        %s489 = sand.u32 %s122, 1
        %s490 = scalar_lea.sflag [#allocation4], %s489
        %s491 = sand.u32 %s122, 1
        %s492 = smul.addr %s491, 4
        %s493 = scalar_lea.vmem [#allocation8], %s492
        // Predicated region
        $region45: #{tpu_custom_call.1} parent=31 // pred_check
          %p494 = pneg %p132
        $region46: #{tpu_custom_call.1} parent=31 // pred_check_branch
          %496 = sbr.rel (%p494) target = $region48
        $region47: #{tpu_custom_call.1} parent=31 // pred_region
          %s498 = ssub.s32 64, 64
          %499 = vsyncadd %s490, %s498
          %s500 = sadd.s32 %s28, %s27
          %s501 = smul.addr %s500, 64
          %s502 = scalar_lea.hbm %s3, %s501
          %s504 = sshll.u32 %s493, 4
          %s505 = int_to_ptr.vmem [resolvable:$true] %s504
          %507 = dma.vmem_to_hbm [thread:$0]  %s505, 64, %s502, %s490
        $region48: #{tpu_custom_call.1} parent=31 // pred_fallthru
          _
      $region32: #{tpu_custom_call.1} parent=5 // pred_fallthru
        _
      %p508 = scmp.le.s32.totalorder 2, %s18
      // Predicated region
      $region49: #{tpu_custom_call.1} parent=5 // pred_check
        %p509 = pneg %p508
      $region50: #{tpu_custom_call.1} parent=5 // pred_check_branch
        %511 = sbr.rel (%p509) target = $region52
      $region51: #{tpu_custom_call.1} parent=5 // pred_region
        %s512 = ssub.s32 %s18, 2
        // Predicated region
        $region53: #{tpu_custom_call.1} parent=51 // pred_check
          %p513 = pneg %p138
        $region54: #{tpu_custom_call.1} parent=51 // pred_check_branch
          %515 = sbr.rel (%p513) target = $region56
        $region55: #{tpu_custom_call.1} parent=51 // pred_region
          %s516 = sand.u32 %s123, 1
          %s517 = scalar_lea.sflag [#allocation4], %s516
          %s518 = sand.u32 %s123, 1
          %s519 = smul.addr %s518, 4
          %s520 = scalar_lea.vmem [#allocation8], %s519
          %521 = dma.done %s517, 64
        $region56: #{tpu_custom_call.1} parent=51 // pred_fallthru
          _
      $region52: #{tpu_custom_call.1} parent=5 // pred_fallthru
        _
    $region6: #{tpu_custom_call.1} parent=1 // loop_footer
      %s22 = sadd.s32 1, %s18
    $region7: #{tpu_custom_call.1} parent=1 // loop_footer_branch
      %17 = sbr.rel target = $region3
    $region8: #{tpu_custom_call.1} parent=1 // loop_exit
      _
    %522 = vsyncpa [#allocation3], 1
    %s523 = scalar_lea.sflag [#allocation3], 1
    %524 = vsyncpa %s523, 1
    %525 = vsyncpa [#allocation6], 1
    %s526 = scalar_lea.sflag [#allocation6], 1
    %527 = vsyncpa %s526, 1
    %528 = vsyncpa [#allocation4], 1
    %s529 = scalar_lea.sflag [#allocation4], 1
    %530 = vsyncpa %s529, 1

</llo_original>
